<compile_context>
chip_gen: v5e
topology: v5e:2x2
jax: 0.10.0
libtpu: 0.0.40
codegen_flags: <defaults>
</compile_context>

<pallas_src>
import jax
import jax.numpy as jnp
from jax.experimental import pallas as pl
from jax.experimental.pallas import tpu as pltpu


def _round_up(v, m):
    return ((v + m - 1) // m) * m


def _pick_spatial_tile(S, dim, out_dim, hidden, x_itemsize, max_tile):
    """Pick a lane-tile (multiple of 128) that fits a ~20MB VMEM budget and
    splits S into near-equal tiles to minimize padding."""
    budget = 20 * 1024 * 1024
    # per-lane bytes: double-buffered in/out blocks + rough f32 temps
    per_lane = 2 * (dim + out_dim) * x_itemsize + 4 * (4 * out_dim + 2 * hidden + dim)
    t = budget // max(per_lane, 1)
    t = max(128, min(int(max_tile), int(t)))
    t = (t // 128) * 128
    n = -(-S // t)                          # number of spatial tiles (ceil)
    tile = _round_up(-(-S // n), 128)       # near-equal split, lane aligned
    return tile, n


def _entropy_params_kernel(x_ref, wmix_t_ref, aux_ref, wkr_t_ref, wval_t_ref,
                           o_ref):
    # x_ref:     (1, dim, TL)              spatial tile, channels on sublanes
    # wmix_t:    (out_dim, dim)            mix.weight (1x1 conv), input dtype
    # aux:       (out_dim, 3)  f32         columns: [b_mix, gamma, beta]
    # wkr_t:     (hidden+out_dim, out_dim) f32, concat(key.weight, receptance.weight)
    # wval_t:    (out_dim, hidden)         f32, value.weight
    # o_ref:     (1, out_dim, TL)
    x = x_ref[0]                                              # (dim, TL)
    aux = aux_ref[...]                                        # (out_dim, 3) f32

    # 1x1 conv == channel matmul (MXU, f32 accumulate) + bias broadcast over lanes.
    mixed = jnp.dot(wmix_t_ref[...], x,
                    preferred_element_type=jnp.float32)       # (out_dim, TL)
    mixed = mixed + aux[:, 0:1]
    identity = mixed

    # LayerNorm over channels (sublane axis), eps = 1e-5 (PyTorch default).
    out_dim = mixed.shape[0]
    inv_n = 1.0 / out_dim
    mu = jnp.sum(mixed, axis=0, keepdims=True) * inv_n        # (1, TL)
    diff = mixed - mu
    var = jnp.sum(diff * diff, axis=0, keepdims=True) * inv_n
    xn = diff * jax.lax.rsqrt(var + 1e-5)
    xn = xn * aux[:, 1:2] + aux[:, 2:3]

    # Fused key + receptance matmul, split along sublanes afterwards.
    kr = jnp.dot(wkr_t_ref[...], xn,
                 preferred_element_type=jnp.float32)          # (hidden+out_dim, TL)
    hidden = wval_t_ref.shape[1]
    k = jnp.square(jnp.maximum(kr[:hidden], 0.0))             # relu^2, (hidden, TL)
    r = jax.nn.sigmoid(kr[hidden:])                           # (out_dim, TL)

    kv = jnp.dot(wval_t_ref[...], k,
                 preferred_element_type=jnp.float32)          # (out_dim, TL)

    o_ref[0] = (r * kv + identity).astype(o_ref.dtype)


def entropy_parameters_block(x_nchw, params, *, spatial_tile=2048):
    """x_nchw: (B, dim, H, W). Returns (B, out_dim, H, W)."""
    B, dim, H, W = x_nchw.shape
    w_mix = params["w_mix"]                                   # (dim, out_dim)
    out_dim = w_mix.shape[1]
    hidden = params["w_key"].shape[1]

    # Pre-arrange the (tiny) weights once, outside the kernel.
    w_mix_t = jnp.transpose(w_mix)                            # (out_dim, dim), input dtype
    w_kr_t = jnp.concatenate(
        [jnp.transpose(params["w_key"]),                      # (hidden, out_dim)
         jnp.transpose(params["w_rec"])], axis=0).astype(jnp.float32)
    w_val_t = jnp.transpose(params["w_val"]).astype(jnp.float32)   # (out_dim, hidden)
    aux = jnp.stack([params["b_mix"].reshape(-1),
                     params["gamma"].reshape(-1),
                     params["beta"].reshape(-1)],
                    axis=1).astype(jnp.float32)               # (out_dim, 3)

    # Native NCHW view: channels on sublanes, spatial (H*W) on lanes.
    S = H * W
    tile, n_sp = _pick_spatial_tile(S, dim, out_dim, hidden,
                                    jnp.dtype(x_nchw.dtype).itemsize,
                                    spatial_tile)
    S_pad = n_sp * tile
    x_fl = x_nchw.reshape(B, dim, S)
    if S_pad != S:
        # Pad spatial axis to a tile multiple; padded lanes are discarded later.
        x_fl = jnp.pad(x_fl, ((0, 0), (0, 0), (0, S_pad - S)))

    full = lambda b, s: (0, 0)   # weights: one resident block, reused every step
    out = pl.pallas_call(
        _entropy_params_kernel,
        out_shape=jax.ShapeDtypeStruct((B, out_dim, S_pad), x_nchw.dtype),
        grid_spec=pltpu.PrefetchScalarGridSpec(
            num_scalar_prefetch=0,
            grid=(B, n_sp),
            in_specs=[
                pl.BlockSpec((1, dim, tile), lambda b, s: (b, 0, s)),
                pl.BlockSpec(w_mix_t.shape, full),
                pl.BlockSpec(aux.shape, full),
                pl.BlockSpec(w_kr_t.shape, full),
                pl.BlockSpec(w_val_t.shape, full),
            ],
            out_specs=pl.BlockSpec((1, out_dim, tile), lambda b, s: (b, 0, s)),
        ),
        compiler_params=pltpu.CompilerParams(
            dimension_semantics=("parallel", "parallel"),
            vmem_limit_bytes=32 * 1024 * 1024),
    )(x_fl, w_mix_t, aux, w_kr_t, w_val_t)

    if S_pad != S:
        out = out[:, :, :S]
    return out.reshape(B, out_dim, H, W)


def make_params(key, dim, out_dim, expansion_factor=2, dtype=jnp.float32):
    hidden = int(expansion_factor * out_dim)
    ks = jax.random.split(key, 5)
    scale = 0.1
    return {
        "w_mix": scale * jax.random.normal(ks[0], (dim, out_dim), dtype),
        "b_mix": scale * jax.random.normal(ks[1], (1, out_dim), dtype),
        "gamma": jnp.ones((1, out_dim), dtype),
        "beta": jnp.zeros((1, out_dim), dtype),
        "w_key": scale * jax.random.normal(ks[2], (out_dim, hidden), dtype),
        "w_val": scale * jax.random.normal(ks[3], (hidden, out_dim), dtype),
        "w_rec": scale * jax.random.normal(ks[4], (out_dim, out_dim), dtype),
    }


def _reference(x_nchw, params):
    # Pure-JAX reference matching the PyTorch forward semantics.
    B, dim, H, W = x_nchw.shape
    x = jnp.einsum("bchw,co->bohw", x_nchw, params["w_mix"]) + \
        params["b_mix"].reshape(1, -1, 1, 1)
    identity = x
    t = jnp.transpose(x, (0, 2, 3, 1)).reshape(B, H * W, -1)
    mu = jnp.mean(t, axis=-1, keepdims=True)
    var = jnp.mean((t - mu) ** 2, axis=-1, keepdims=True)
    tn = (t - mu) / jnp.sqrt(var + 1e-5) * params["gamma"] + params["beta"]
    k = jnp.square(jax.nn.relu(tn @ params["w_key"]))
    kv = k @ params["w_val"]
    y = jax.nn.sigmoid(tn @ params["w_rec"]) * kv
    y = jnp.transpose(y.reshape(B, H, W, -1), (0, 3, 1, 2))
    return y + identity


if __name__ == "__main__":
    key = jax.random.PRNGKey(0)
    k_x, k_p = jax.random.split(key)

    B, dim, H, W = 2, 8, 16, 16
    out_dim, expansion = 16, 2

    x = jax.random.normal(k_x, (B, dim, H, W), jnp.float32)
    params = make_params(k_p, dim, out_dim, expansion)

    y = entropy_parameters_block(x, params)
    y = jax.block_until_ready(y)

    y_ref = _reference(x, params)
    assert y.shape == (B, out_dim, H, W)
    assert jnp.allclose(y, y_ref, atol=1e-4, rtol=1e-4), "mismatch vs reference"

    print("KERNEL_OK")
</pallas_src>

<mosaic_0001>
module attributes {stable_mosaic.version = 11 : i64} {
  func.func @_entropy_params_kernel(%arg0: i32, %arg1: i32, %arg2: memref<1x8x256xf32, #tpu.memory_space<vmem>>, %arg3: memref<16x8xf32, #tpu.memory_space<vmem>>, %arg4: memref<16x3xf32, #tpu.memory_space<vmem>>, %arg5: memref<48x16xf32, #tpu.memory_space<vmem>>, %arg6: memref<16x32xf32, #tpu.memory_space<vmem>>, %arg7: memref<1x16x256xf32, #tpu.memory_space<vmem>>) attributes {dimension_semantics = [#tpu.dimension_semantics<parallel>, #tpu.dimension_semantics<parallel>], iteration_bounds = array<i64: 2, 1>, scalar_prefetch = 0 : i64, scratch_operands = 0 : i64, tpu.core_type = #tpu.core_type<tc>, window_params = [{transform_indices = @transform_0, window_bounds = array<i64: 1, 8, 256>}, {pipeline_mode = #tpu.pipeline_mode<synchronous>, transform_indices = @transform_1, window_bounds = array<i64: 16, 8>}, {pipeline_mode = #tpu.pipeline_mode<synchronous>, transform_indices = @transform_2, window_bounds = array<i64: 16, 3>}, {pipeline_mode = #tpu.pipeline_mode<synchronous>, transform_indices = @transform_3, window_bounds = array<i64: 48, 16>}, {pipeline_mode = #tpu.pipeline_mode<synchronous>, transform_indices = @transform_4, window_bounds = array<i64: 16, 32>}, {transform_indices = @transform_5, window_bounds = array<i64: 1, 16, 256>}]} {
    %c0 = arith.constant 0 : index
    %c0_0 = arith.constant 0 : index
    %c0_1 = arith.constant 0 : index
    %0 = vector.load %arg2[%c0, %c0_0, %c0_1] : memref<1x8x256xf32, #tpu.memory_space<vmem>>, vector<1x8x256xf32>
    %1 = vector.shape_cast %0 : vector<1x8x256xf32> to vector<8x256xf32>
    %c0_2 = arith.constant 0 : index
    %c0_3 = arith.constant 0 : index
    %2 = vector.load %arg4[%c0_2, %c0_3] : memref<16x3xf32, #tpu.memory_space<vmem>>, vector<16x3xf32>
    %c0_4 = arith.constant 0 : index
    %c0_5 = arith.constant 0 : index
    %3 = vector.load %arg3[%c0_4, %c0_5] : memref<16x8xf32, #tpu.memory_space<vmem>>, vector<16x8xf32>
    %cst = arith.constant dense<0.000000e+00> : vector<16x256xf32>
    %4 = tpu.matmul %3, %1, %cst {dimension_numbers = #tpu.dot_dimension_numbers<[1], [0], [0], [1], [0, 0, 1, 1], [], []>} : vector<16x8xf32>, vector<8x256xf32>, vector<16x256xf32> -> vector<16x256xf32>
    %5 = vector.extract_strided_slice %2 {offsets = [0, 0], sizes = [16, 1], strides = [1, 1]} : vector<16x3xf32> to vector<16x1xf32>
    %6 = vector.broadcast %5 : vector<16x1xf32> to vector<16x256xf32>
    %7 = arith.addf %4, %6 : vector<16x256xf32>
    %cst_6 = arith.constant dense<0.000000e+00> : vector<256xf32>
    %8 = vector.multi_reduction <add>, %7, %cst_6 [0] : vector<16x256xf32> to vector<256xf32>
    %9 = vector.shape_cast %8 : vector<256xf32> to vector<1x256xf32>
    %cst_7 = arith.constant 6.250000e-02 : f32
    %10 = vector.broadcast %cst_7 : f32 to vector<1x256xf32>
    %11 = arith.mulf %9, %10 : vector<1x256xf32>
    %12 = vector.broadcast %11 : vector<1x256xf32> to vector<16x256xf32>
    %13 = arith.subf %7, %12 : vector<16x256xf32>
    %14 = arith.mulf %13, %13 : vector<16x256xf32>
    %cst_8 = arith.constant dense<0.000000e+00> : vector<256xf32>
    %15 = vector.multi_reduction <add>, %14, %cst_8 [0] : vector<16x256xf32> to vector<256xf32>
    %16 = vector.shape_cast %15 : vector<256xf32> to vector<1x256xf32>
    %cst_9 = arith.constant 6.250000e-02 : f32
    %17 = vector.broadcast %cst_9 : f32 to vector<1x256xf32>
    %18 = arith.mulf %16, %17 : vector<1x256xf32>
    %cst_10 = arith.constant 9.99999974E-6 : f32
    %19 = vector.broadcast %cst_10 : f32 to vector<1x256xf32>
    %20 = arith.addf %18, %19 : vector<1x256xf32>
    %21 = math.rsqrt %20 : vector<1x256xf32>
    %22 = vector.broadcast %21 : vector<1x256xf32> to vector<16x256xf32>
    %23 = arith.mulf %13, %22 : vector<16x256xf32>
    %24 = vector.extract_strided_slice %2 {offsets = [0, 1], sizes = [16, 1], strides = [1, 1]} : vector<16x3xf32> to vector<16x1xf32>
    %25 = vector.broadcast %24 : vector<16x1xf32> to vector<16x256xf32>
    %26 = arith.mulf %23, %25 : vector<16x256xf32>
    %27 = vector.extract_strided_slice %2 {offsets = [0, 2], sizes = [16, 1], strides = [1, 1]} : vector<16x3xf32> to vector<16x1xf32>
    %28 = vector.broadcast %27 : vector<16x1xf32> to vector<16x256xf32>
    %29 = arith.addf %26, %28 : vector<16x256xf32>
    %c0_11 = arith.constant 0 : index
    %c0_12 = arith.constant 0 : index
    %30 = vector.load %arg5[%c0_11, %c0_12] : memref<48x16xf32, #tpu.memory_space<vmem>>, vector<48x16xf32>
    %cst_13 = arith.constant dense<0.000000e+00> : vector<48x256xf32>
    %31 = tpu.matmul %30, %29, %cst_13 {dimension_numbers = #tpu.dot_dimension_numbers<[1], [0], [0], [1], [0, 0, 1, 1], [], []>} : vector<48x16xf32>, vector<16x256xf32>, vector<48x256xf32> -> vector<48x256xf32>
    %32 = vector.extract_strided_slice %31 {offsets = [0, 0], sizes = [32, 256], strides = [1, 1]} : vector<48x256xf32> to vector<32x256xf32>
    %cst_14 = arith.constant 0.000000e+00 : f32
    %33 = vector.broadcast %cst_14 : f32 to vector<32x256xf32>
    %34 = arith.maximumf %32, %33 : vector<32x256xf32>
    %35 = arith.mulf %34, %34 : vector<32x256xf32>
    %36 = vector.extract_strided_slice %31 {offsets = [32, 0], sizes = [16, 256], strides = [1, 1]} : vector<48x256xf32> to vector<16x256xf32>
    %37 = arith.negf %36 : vector<16x256xf32>
    %38 = math.exp %37 : vector<16x256xf32>
    %cst_15 = arith.constant 1.000000e+00 : f32
    %39 = vector.broadcast %cst_15 : f32 to vector<16x256xf32>
    %40 = arith.addf %39, %38 : vector<16x256xf32>
    %41 = arith.divf %39, %40 : vector<16x256xf32>
    %c0_16 = arith.constant 0 : index
    %c0_17 = arith.constant 0 : index
    %42 = vector.load %arg6[%c0_16, %c0_17] : memref<16x32xf32, #tpu.memory_space<vmem>>, vector<16x32xf32>
    %cst_18 = arith.constant dense<0.000000e+00> : vector<16x256xf32>
    %43 = tpu.matmul %42, %35, %cst_18 {dimension_numbers = #tpu.dot_dimension_numbers<[1], [0], [0], [1], [0, 0, 1, 1], [], []>} : vector<16x32xf32>, vector<32x256xf32>, vector<16x256xf32> -> vector<16x256xf32>
    %44 = arith.mulf %41, %43 : vector<16x256xf32>
    %45 = arith.addf %44, %7 : vector<16x256xf32>
    %c0_19 = arith.constant 0 : index
    %c0_20 = arith.constant 0 : index
    %c0_21 = arith.constant 0 : index
    %46 = vector.load %arg7[%c0_19, %c0_20, %c0_21] : memref<1x16x256xf32, #tpu.memory_space<vmem>>, vector<1x16x256xf32>
    %47 = vector.shape_cast %46 : vector<1x16x256xf32> to vector<16x256xf32>
    %48 = vector.shape_cast %45 : vector<16x256xf32> to vector<1x16x256xf32>
    tpu.vector_store %arg7[%c0_19, %c0_20, %c0_21], %48 {strides = array<i32>} : memref<1x16x256xf32, #tpu.memory_space<vmem>>, vector<1x16x256xf32>,
    return
  }
  func.func @transform_0(%arg0: i32, %arg1: i32) -> (i32, i32, i32) {
    %c0_i32 = arith.constant 0 : i32
    %c0_i32_0 = arith.constant 0 : i32
    return %arg0, %c0_i32, %arg1 : i32, i32, i32
  }
  func.func @transform_1(%arg0: i32, %arg1: i32) -> (i32, i32) {
    %c0_i32 = arith.constant 0 : i32
    %c0_i32_0 = arith.constant 0 : i32
    %c0_i32_1 = arith.constant 0 : i32
    return %c0_i32, %c0_i32_0 : i32, i32
  }
  func.func @transform_2(%arg0: i32, %arg1: i32) -> (i32, i32) {
    %c0_i32 = arith.constant 0 : i32
    %c0_i32_0 = arith.constant 0 : i32
    %c0_i32_1 = arith.constant 0 : i32
    return %c0_i32, %c0_i32_0 : i32, i32
  }
  func.func @transform_3(%arg0: i32, %arg1: i32) -> (i32, i32) {
    %c0_i32 = arith.constant 0 : i32
    %c0_i32_0 = arith.constant 0 : i32
    %c0_i32_1 = arith.constant 0 : i32
    return %c0_i32, %c0_i32_0 : i32, i32
  }
  func.func @transform_4(%arg0: i32, %arg1: i32) -> (i32, i32) {
    %c0_i32 = arith.constant 0 : i32
    %c0_i32_0 = arith.constant 0 : i32
    %c0_i32_1 = arith.constant 0 : i32
    return %c0_i32, %c0_i32_0 : i32, i32
  }
  func.func @transform_5(%arg0: i32, %arg1: i32) -> (i32, i32, i32) {
    %c0_i32 = arith.constant 0 : i32
    %c0_i32_0 = arith.constant 0 : i32
    return %arg0, %c0_i32, %arg1 : i32, i32, i32
  }
}

</mosaic_0001>

<llo_original>
// kernel: tpu_custom_call.1
$region0: #{tpu_custom_call.1}
  #allocation0 [shape = 'u32[]', space=smem, size = 0x4, offset = 0x4, fixed_abs, tag = 'smem constant byte address 0x4 - core index']
  #allocation1 [shape = 'u32[72,128]{1,0:T(1,128)}', space=vmem, size = 0x9000, scoped, tag = 'internal scratch']
  %s0 = inlined_call_operand.vmem [shape: f32[2,8,256], index: 0, kind: input, shape index: {}]
  %s1 = inlined_call_operand.vmem [shape: f32[16,8], index: 1, kind: input, shape index: {}]
  %s2 = inlined_call_operand.vmem [shape: f32[16,3], index: 2, kind: input, shape index: {}]
  %s3 = inlined_call_operand.vmem [shape: f32[48,16], index: 3, kind: input, shape index: {}]
  %s4 = inlined_call_operand.vmem [shape: f32[16,32], index: 4, kind: input, shape index: {}]
  %s5 = inlined_call_operand.hbm [shape: f32[2,16,256], index: 5, kind: output, shape index: {}]
  %s6 = sld [smem:[#allocation0]]
  $region53: #{tpu_custom_call.1} parent=0
    _
  %s8 = ssub.s32 1, %s6
  %s9 = scalar_select 0, %s8, %s6
  $region1: #{tpu_custom_call.1} parent=0
    #allocation2 [shape = 'u8[32768]{0}', space=vmem, size = 0x8000, scoped, tag = 'output window, operand 0']
    #allocation3 [shape = 's32[2]{0}', space=sflag, size = 0x8, scoped, tag = 'scoped memory for tpu_custom_call.1']
    %10 = vsyncpa [#allocation3], 0
    %s11 = scalar_lea.sflag [#allocation3], 1
    %12 = vsyncpa %s11, 0
    loop: start=0, step=1, limit=4
    $region2: #{tpu_custom_call.1} parent=1 // loop_pre_header
      _
    $region3: #{tpu_custom_call.1} parent=1 // loop_header
      %s14 = sphi 0, %s18
      %p15 = scmp.ge.s32.totalorder %s14, 4
      %s21 = sphi 0, %s33
      %s22 = sphi 0, %s29
      %s23 = sphi 0, %s21
      %s24 = sphi 0, %s22
      %s25 = sphi 0, %s23
      %s26 = sphi 0, %s24
      %s38 = sphi 0, %s40
      %s41 = sphi 0, %s38
      %s42 = sphi 0, %s41
      %s58 = sphi 0, %s42
      %s62 = sphi 0, %s62
      %s64 = sphi 0, %s62
      %s65 = sphi 0, %s64
      %s79 = sphi 0, %s65
      %s83 = sphi 0, %s83
      %s85 = sphi 0, %s83
      %s86 = sphi 0, %s85
      %s100 = sphi 0, %s86
      %s104 = sphi 0, %s104
      %s106 = sphi 0, %s104
      %s107 = sphi 0, %s106
      %s121 = sphi 0, %s107
      %s125 = sphi 0, %s125
      %s127 = sphi 0, %s125
      %s128 = sphi 0, %s127
      %s142 = sphi 0, %s128
      %s150 = sphi 0, %s152
      %s153 = sphi 0, %s150
      %s154 = sphi 0, %s153
      %s170 = sphi 0, %s154
    $region4: #{tpu_custom_call.1} parent=1 // loop_header_branch
      %17 = sbr.rel (%p15) target = $region8
    $region5: #{tpu_custom_call.1} parent=1 // loop_body
      %s19 = ssub.s32 %s14, 1
      %s20 = ssub.s32 %s14, 2
      %s27 = sadd.s32 1, %s22
      %p28 = scmp.ge.s32.totalorder %s27, 1
      %s29 = scalar_select %p28, 0, %s27
      %s30 = sadd.s32 1, %s21
      %s31 = scalar_select %p28, %s30, %s21
      %p32 = scmp.ge.s32.totalorder %s31, 2
      %s33 = scalar_select %p32, 0, %s31
      %s34 = ssub.s32 %s21, %s33
      %s35 = ssub.s32 %s22, %s29
      %s36 = sor.u32 %s34, %s35
      %p37 = scmp.eq.s32.totalorder %s36, 0
      %s39 = sadd.s32 %s38, 1
      %s40 = scalar_select %p37, %s38, %s39
      %p43 = pneg %p37
      %p44 = scmp.eq.s32.totalorder %s14, 1
      %p45 = por %p43, %p44
      %p46 = scmp.ne.s32.totalorder %s38, %s41
      %p47 = scmp.eq.s32.totalorder %s14, 0
      %p48 = por %p46, %p47
      %p49 = scmp.ne.s32.totalorder %s38, %s41
      %p50 = scmp.eq.s32.totalorder %s19, 1
      %p51 = por %p49, %p50
      %p52 = scmp.ne.s32.totalorder %s41, %s42
      %p53 = scmp.eq.s32.totalorder %s19, 0
      %p54 = por %p52, %p53
      %p55 = scmp.ne.s32.totalorder %s41, %s42
      %p56 = scmp.eq.s32.totalorder %s20, 1
      %p57 = por %p55, %p56
      %p59 = scmp.ne.s32.totalorder %s42, %s58
      %p60 = scmp.eq.s32.totalorder %s20, 0
      %p61 = por %p59, %p60
      %s63 = sadd.s32 %s62, 1
      %p66 = scmp.eq.s32.totalorder %s14, 1
      %p67 = scmp.ne.s32.totalorder %s62, %s64
      %p68 = scmp.eq.s32.totalorder %s14, 0
      %p69 = por %p67, %p68
      %p70 = scmp.ne.s32.totalorder %s62, %s64
      %p71 = scmp.eq.s32.totalorder %s19, 1
      %p72 = por %p70, %p71
      %p73 = scmp.ne.s32.totalorder %s64, %s65
      %p74 = scmp.eq.s32.totalorder %s19, 0
      %p75 = por %p73, %p74
      %p76 = scmp.ne.s32.totalorder %s64, %s65
      %p77 = scmp.eq.s32.totalorder %s20, 1
      %p78 = por %p76, %p77
      %p80 = scmp.ne.s32.totalorder %s65, %s79
      %p81 = scmp.eq.s32.totalorder %s20, 0
      %p82 = por %p80, %p81
      %s84 = sadd.s32 %s83, 1
      %p87 = scmp.eq.s32.totalorder %s14, 1
      %p88 = scmp.ne.s32.totalorder %s83, %s85
      %p89 = scmp.eq.s32.totalorder %s14, 0
      %p90 = por %p88, %p89
      %p91 = scmp.ne.s32.totalorder %s83, %s85
      %p92 = scmp.eq.s32.totalorder %s19, 1
      %p93 = por %p91, %p92
      %p94 = scmp.ne.s32.totalorder %s85, %s86
      %p95 = scmp.eq.s32.totalorder %s19, 0
      %p96 = por %p94, %p95
      %p97 = scmp.ne.s32.totalorder %s85, %s86
      %p98 = scmp.eq.s32.totalorder %s20, 1
      %p99 = por %p97, %p98
      %p101 = scmp.ne.s32.totalorder %s86, %s100
      %p102 = scmp.eq.s32.totalorder %s20, 0
      %p103 = por %p101, %p102
      %s105 = sadd.s32 %s104, 1
      %p108 = scmp.eq.s32.totalorder %s14, 1
      %p109 = scmp.ne.s32.totalorder %s104, %s106
      %p110 = scmp.eq.s32.totalorder %s14, 0
      %p111 = por %p109, %p110
      %p112 = scmp.ne.s32.totalorder %s104, %s106
      %p113 = scmp.eq.s32.totalorder %s19, 1
      %p114 = por %p112, %p113
      %p115 = scmp.ne.s32.totalorder %s106, %s107
      %p116 = scmp.eq.s32.totalorder %s19, 0
      %p117 = por %p115, %p116
      %p118 = scmp.ne.s32.totalorder %s106, %s107
      %p119 = scmp.eq.s32.totalorder %s20, 1
      %p120 = por %p118, %p119
      %p122 = scmp.ne.s32.totalorder %s107, %s121
      %p123 = scmp.eq.s32.totalorder %s20, 0
      %p124 = por %p122, %p123
      %s126 = sadd.s32 %s125, 1
      %p129 = scmp.eq.s32.totalorder %s14, 1
      %p130 = scmp.ne.s32.totalorder %s125, %s127
      %p131 = scmp.eq.s32.totalorder %s14, 0
      %p132 = por %p130, %p131
      %p133 = scmp.ne.s32.totalorder %s125, %s127
      %p134 = scmp.eq.s32.totalorder %s19, 1
      %p135 = por %p133, %p134
      %p136 = scmp.ne.s32.totalorder %s127, %s128
      %p137 = scmp.eq.s32.totalorder %s19, 0
      %p138 = por %p136, %p137
      %p139 = scmp.ne.s32.totalorder %s127, %s128
      %p140 = scmp.eq.s32.totalorder %s20, 1
      %p141 = por %p139, %p140
      %p143 = scmp.ne.s32.totalorder %s128, %s142
      %p144 = scmp.eq.s32.totalorder %s20, 0
      %p145 = por %p143, %p144
      %s146 = ssub.s32 %s21, %s33
      %s147 = ssub.s32 %s22, %s29
      %s148 = sor.u32 %s146, %s147
      %p149 = scmp.eq.s32.totalorder %s148, 0
      %s151 = sadd.s32 %s150, 1
      %s152 = scalar_select %p149, %s150, %s151
      %p155 = pneg %p149
      %p156 = scmp.eq.s32.totalorder %s14, 1
      %p157 = por %p155, %p156
      %p158 = scmp.ne.s32.totalorder %s150, %s153
      %p159 = scmp.eq.s32.totalorder %s14, 0
      %p160 = por %p158, %p159
      %p161 = scmp.ne.s32.totalorder %s150, %s153
      %p162 = scmp.eq.s32.totalorder %s19, 1
      %p163 = por %p161, %p162
      %p164 = scmp.ne.s32.totalorder %s153, %s154
      %p165 = scmp.eq.s32.totalorder %s19, 0
      %p166 = por %p164, %p165
      %p167 = scmp.ne.s32.totalorder %s153, %s154
      %p168 = scmp.eq.s32.totalorder %s20, 1
      %p169 = por %p167, %p168
      %p171 = scmp.ne.s32.totalorder %s154, %s170
      %p172 = scmp.eq.s32.totalorder %s20, 0
      %p173 = por %p171, %p172
      %p174 = scmp.le.s32.totalorder 1, %s14
      %p175 = scmp.lt.s32.totalorder %s14, 3
      %p176 = pnand %p174, %p175
      %p177 = pneg %p176
      // Predicated region
      $region9: #{tpu_custom_call.1} parent=5 // pred_check
        _
      $region10: #{tpu_custom_call.1} parent=5 // pred_check_branch
        %179 = sbr.rel (%p176) target = $region12
      $region11: #{tpu_custom_call.1} parent=5 // pred_region
        %s180 = ssub.s32 %s14, 1
        // Predicated region
        $region13: #{tpu_custom_call.1} parent=11 // pred_check
          %p181 = pneg %p75
        $region14: #{tpu_custom_call.1} parent=11 // pred_check_branch
          %183 = sbr.rel (%p181) target = $region16
        $region15: #{tpu_custom_call.1} parent=11 // pred_region
          _
        $region16: #{tpu_custom_call.1} parent=11 // pred_fallthru
          _
        // Predicated region
        $region17: #{tpu_custom_call.1} parent=11 // pred_check
          %p184 = pneg %p96
        $region18: #{tpu_custom_call.1} parent=11 // pred_check_branch
          %186 = sbr.rel (%p184) target = $region20
        $region19: #{tpu_custom_call.1} parent=11 // pred_region
          _
        $region20: #{tpu_custom_call.1} parent=11 // pred_fallthru
          _
        // Predicated region
        $region21: #{tpu_custom_call.1} parent=11 // pred_check
          %p187 = pneg %p117
        $region22: #{tpu_custom_call.1} parent=11 // pred_check_branch
          %189 = sbr.rel (%p187) target = $region24
        $region23: #{tpu_custom_call.1} parent=11 // pred_region
          _
        $region24: #{tpu_custom_call.1} parent=11 // pred_fallthru
          _
        // Predicated region
        $region25: #{tpu_custom_call.1} parent=11 // pred_check
          %p190 = pneg %p138
        $region26: #{tpu_custom_call.1} parent=11 // pred_check_branch
          %192 = sbr.rel (%p190) target = $region28
        $region27: #{tpu_custom_call.1} parent=11 // pred_region
          _
        $region28: #{tpu_custom_call.1} parent=11 // pred_fallthru
          _
      $region12: #{tpu_custom_call.1} parent=5 // pred_fallthru
        _
      %p193 = scmp.lt.s32.totalorder %s14, 2
      // Predicated region
      $region29: #{tpu_custom_call.1} parent=5 // pred_check
        %p194 = pneg %p193
      $region30: #{tpu_custom_call.1} parent=5 // pred_check_branch
        %196 = sbr.rel (%p194) target = $region32
      $region31: #{tpu_custom_call.1} parent=5 // pred_region
        // Predicated region
        $region33: #{tpu_custom_call.1} parent=31 // pred_check
          %p197 = pneg %p48
        $region34: #{tpu_custom_call.1} parent=31 // pred_check_branch
          %199 = sbr.rel (%p197) target = $region36
        $region35: #{tpu_custom_call.1} parent=31 // pred_region
          %s200 = smul.u32 2, %s22
          %p201 = scmp.lt.s32.totalorder %s21, 1
          %s202 = scalar_select %p201, %s21, 1
          %p203 = scmp.lt.s32.totalorder %s200, 1
          %s204 = scalar_select %p203, %s200, 1
          %s205 = smul.addr %s202, 2
          %s206 = sadd.s32 %s204, %s205
          %s207 = smul.addr %s206, 8
          %s208 = scalar_lea.vmem %s0, %s207
          %s209 = smul.u32 2, %s22
        $region36: #{tpu_custom_call.1} parent=31 // pred_fallthru
          _
      $region32: #{tpu_custom_call.1} parent=5 // pred_fallthru
        _
      %p210 = scmp.le.s32.totalorder 1, %s14
      %p211 = scmp.lt.s32.totalorder %s14, 3
      %p212 = pnand %p210, %p211
      %p213 = pneg %p212
      // Predicated region
      $region37: #{tpu_custom_call.1} parent=5 // pred_check
        _
      $region38: #{tpu_custom_call.1} parent=5 // pred_check_branch
        %215 = sbr.rel (%p212) target = $region40
      $region39: #{tpu_custom_call.1} parent=5 // pred_region
        %s216 = ssub.s32 %s14, 1
        %s217 = smul.u32 2, %s24
        %p218 = scmp.lt.s32.totalorder %s23, 1
        %s219 = scalar_select %p218, %s23, 1
        %p220 = scmp.lt.s32.totalorder %s217, 1
        %s221 = scalar_select %p220, %s217, 1
        %s222 = smul.addr %s219, 2
        %s223 = sadd.s32 %s221, %s222
        %s224 = smul.addr %s223, 8
        %s225 = scalar_lea.vmem %s0, %s224
        %p226 = pneg %p54
        %p227 = pneg %p51
        %p228 = pneg %p75
        %p229 = pneg %p72
        %p230 = pneg %p96
        %p231 = pneg %p93
        %p232 = pneg %p117
        %p233 = pneg %p114
        %p234 = pneg %p138
        %p235 = pneg %p135
        %p236 = pneg %p166
        %p237 = pneg %p163
        %s238 = sand.u32 %s153, 1
        %s239 = scalar_lea.sflag [#allocation3], %s238
        %s240 = sand.u32 %s153, 1
        %s241 = smul.addr %s240, 32
        %s242 = scalar_lea.vmem [#allocation2], %s241
        %s243 = smul.u32 2, %s24
        %p244 = scmp.lt.s32.totalorder %s23, 1
        %s245 = scalar_select %p244, %s23, 1
        %p246 = scmp.lt.s32.totalorder %s243, 1
        %s247 = scalar_select %p246, %s243, 1
        %s248 = smul.addr %s245, 2
        %s249 = sadd.s32 %s247, %s248
        %s250 = smul.addr %s249, 8
        %s251 = scalar_lea.vmem %s0, %s250
        %s252 = smul.u32 2, %s24
        %s253 = smul.u32 2, %s24
        %v254 = vld [vmem:[%s251] sm:$0xff]
        %v255 = vld [vmem:[%s251 + $0x8] sm:$0xff]
        %v256 = vld [vmem:[%s2] sm:$0xff]
        %v257 = vld [vmem:[%s2 + $0x8] sm:$0xff]
        %v258 = vld [vmem:[%s1] sm:$0xff]
        %v259 = vld [vmem:[%s1 + $0x8] sm:$0xff]
        %261 = vset.pattern.permute.xlu0 0
        %262 = vperm.xlu0 %261, %v256
        %v263 = vpop.permute.xlu0 %262
        %266 = vset.pattern.permute.xlu0 0
        %267 = vperm.xlu0 %266, %v257
        %v268 = vpop.permute.xlu0 %267
        %vm270 = vcmask 64512
        %v272 = vsel %vm270, %v258, 0
        %v275 = vsel %vm270, %v259, 0
        %277 = vmatpush.msra.mxu0 0.0
        %278 = vmatpush.msra.mxu0 0.0
        %279 = vmatpush.msra.mxu0 0.0
        %280 = vmatpush.msra.mxu0 0.0
        %281 = vmatpush.msra.mxu0 0.0
        %282 = vmatpush.msra.mxu0 0.0
        %283 = vmatpush.msra.mxu0 0.0
        %284 = vmatpush.msra.mxu0 0.0
        %285 = vmatpush.msra.mxu0 0.0
        %286 = vmatpush.msra.mxu0 0.0
        %287 = vmatpush.msra.mxu0 0.0
        %288 = vmatpush.msra.mxu0 0.0
        %289 = vmatpush.msra.mxu0 0.0
        %290 = vmatpush.msra.mxu0 0.0
        %291 = vmatpush.msra.mxu0 0.0
        %292 = vmatpush.msra.mxu0 %v254
        %293 = vmatmul.f32.gmra.mxu0 %v272
        %v294 = vpop.f32.mrf.mxu0
        %v295 = vadd.f32 %v263, %v294
        %296 = vmatmul.f32.gmra.mxu0 %v275
        %v297 = vpop.f32.mrf.mxu0
        %v298 = vadd.f32 %v268, %v297
        %299 = vdwg.mxu0
        %300 = vmatpush.msra.mxu0 0.0
        %301 = vmatpush.msra.mxu0 0.0
        %302 = vmatpush.msra.mxu0 0.0
        %303 = vmatpush.msra.mxu0 0.0
        %304 = vmatpush.msra.mxu0 0.0
        %305 = vmatpush.msra.mxu0 0.0
        %306 = vmatpush.msra.mxu0 0.0
        %307 = vmatpush.msra.mxu0 0.0
        %308 = vmatpush.msra.mxu0 0.0
        %309 = vmatpush.msra.mxu0 0.0
        %310 = vmatpush.msra.mxu0 0.0
        %311 = vmatpush.msra.mxu0 0.0
        %312 = vmatpush.msra.mxu0 0.0
        %313 = vmatpush.msra.mxu0 0.0
        %314 = vmatpush.msra.mxu0 0.0
        %315 = vmatpush.msra.mxu0 %v255
        %316 = vmatmul.f32.gmra.mxu0 %v272
        %v317 = vpop.f32.mrf.mxu0
        %v318 = vadd.f32 %v263, %v317
        %319 = vmatmul.f32.gmra.mxu0 %v275
        %v320 = vpop.f32.mrf.mxu0
        %v321 = vadd.f32 %v268, %v320
        %322 = vdwg.mxu0
        %v323 = vadd.f32 %v295, %v298
        %v324 = vrot.slane %v323, 4
        %v325 = vadd.f32 %v323, %v324
        %v326 = vrot.slane %v325, 2
        %v327 = vadd.f32 %v325, %v326
        %v328 = vrot.slane %v327, 1
        %v329 = vadd.f32 %v327, %v328
        %v330 = vadd.f32 %v318, %v321
        %v331 = vrot.slane %v330, 4
        %v332 = vadd.f32 %v330, %v331
        %v333 = vrot.slane %v332, 2
        %v334 = vadd.f32 %v332, %v333
        %v335 = vrot.slane %v334, 1
        %v336 = vadd.f32 %v334, %v335
        %v337 = vmul.f32 %v329, 0.0625
        %v338 = vmul.f32 %v336, 0.0625
        %v339 = vsub.f32 %v295, %v337
        %v340 = vsub.f32 %v318, %v338
        %v341 = vsub.f32 %v298, %v337
        %v342 = vsub.f32 %v321, %v338
        %v343 = vmul.f32 %v339, %v339
        %v344 = vmul.f32 %v340, %v340
        %v345 = vmul.f32 %v341, %v341
        %v346 = vmul.f32 %v342, %v342
        %v347 = vadd.f32 %v343, %v345
        %v348 = vrot.slane %v347, 4
        %v349 = vadd.f32 %v347, %v348
        %v350 = vrot.slane %v349, 2
        %v351 = vadd.f32 %v349, %v350
        %v352 = vrot.slane %v351, 1
        %v353 = vadd.f32 %v351, %v352
        %v354 = vadd.f32 %v344, %v346
        %v355 = vrot.slane %v354, 4
        %v356 = vadd.f32 %v354, %v355
        %v357 = vrot.slane %v356, 2
        %v358 = vadd.f32 %v356, %v357
        %v359 = vrot.slane %v358, 1
        %v360 = vadd.f32 %v358, %v359
        %v361 = vmul.f32 %v353, 0.0625
        %v362 = vmul.f32 %v360, 0.0625
        %v363 = vadd.f32 %v361, 1e-05
        %v364 = vadd.f32 %v362, 1e-05
        %v365 = vrsqrt.pop %v363
        %v366 = vmul.f32 %v365, %v363
        %v367 = vmul.f32 %v366, %v365
        %v368 = vmul.f32 0.5, %v367
        %v369 = vsub.f32 1.5, %v368
        %v370 = vmul.f32 %v365, %v369
        %vm371 = vweird.f32 %v363
        %vm372 = vweird.f32 %v365
        %vm373 = vmor %vm371, %vm372
        %v374 = vsel %vm373, %v365, %v370
        %v375 = vrsqrt.pop %v364
        %v376 = vmul.f32 %v375, %v364
        %v377 = vmul.f32 %v376, %v375
        %v378 = vmul.f32 0.5, %v377
        %v379 = vsub.f32 1.5, %v378
        %v380 = vmul.f32 %v375, %v379
        %vm381 = vweird.f32 %v364
        %vm382 = vweird.f32 %v375
        %vm383 = vmor %vm381, %vm382
        %v384 = vsel %vm383, %v375, %v380
        %v385 = vmul.f32 %v339, %v374
        %v386 = vmul.f32 %v340, %v384
        %v387 = vmul.f32 %v341, %v374
        %v388 = vmul.f32 %v342, %v384
        %389 = vset.pattern.permute.xlu0 1
        %390 = vperm.xlu0 %389, %v256
        %v391 = vpop.permute.xlu0 %390
        %393 = vset.pattern.permute.xlu0 1
        %394 = vperm.xlu0 %393, %v257
        %v395 = vpop.permute.xlu0 %394
        %v397 = vmul.f32 %v385, %v391
        %v398 = vmul.f32 %v386, %v391
        %v399 = vmul.f32 %v387, %v395
        %v400 = vmul.f32 %v388, %v395
        %401 = vset.pattern.permute.xlu0 2
        %402 = vperm.xlu0 %401, %v256
        %v403 = vpop.permute.xlu0 %402
        %405 = vset.pattern.permute.xlu0 2
        %406 = vperm.xlu0 %405, %v257
        %v407 = vpop.permute.xlu0 %406
        %v409 = vadd.f32 %v397, %v403
        %v410 = vadd.f32 %v398, %v403
        %v411 = vadd.f32 %v399, %v407
        %v412 = vadd.f32 %v400, %v407
        %v413 = vld [vmem:[%s3] sm:$0xff]
        %v414 = vld [vmem:[%s3 + $0x8] sm:$0xff]
        %v415 = vld [vmem:[%s3 + $0x10] sm:$0xff]
        %v416 = vld [vmem:[%s3 + $0x18] sm:$0xff]
        %v417 = vld [vmem:[%s3 + $0x20] sm:$0xff]
        %v418 = vld [vmem:[%s3 + $0x28] sm:$0xff]
        %vm419 = vcmask 130048
        %v421 = vsel %vm419, %v413, 0
        %v424 = vsel %vm419, %v414, 0
        %v427 = vsel %vm419, %v415, 0
        %v430 = vsel %vm419, %v416, 0
        %v433 = vsel %vm419, %v417, 0
        %v436 = vsel %vm419, %v418, 0
        %438 = vmatpush.msra.mxu0 0.0
        %439 = vmatpush.msra.mxu0 0.0
        %440 = vmatpush.msra.mxu0 0.0
        %441 = vmatpush.msra.mxu0 0.0
        %442 = vmatpush.msra.mxu0 0.0
        %443 = vmatpush.msra.mxu0 0.0
        %444 = vmatpush.msra.mxu0 0.0
        %445 = vmatpush.msra.mxu0 0.0
        %446 = vmatpush.msra.mxu0 0.0
        %447 = vmatpush.msra.mxu0 0.0
        %448 = vmatpush.msra.mxu0 0.0
        %449 = vmatpush.msra.mxu0 0.0
        %450 = vmatpush.msra.mxu0 0.0
        %451 = vmatpush.msra.mxu0 0.0
        %452 = vmatpush.msra.mxu0 %v411
        %453 = vmatpush.msra.mxu0 %v409
        %454 = vmatmul.f32.gmra.mxu0 %v421
        %v455 = vpop.f32.mrf.mxu0
        %v456 = vadd.f32 0.0, %v455
        %457 = vmatmul.f32.gmra.mxu0 %v424
        %v458 = vpop.f32.mrf.mxu0
        %v459 = vadd.f32 0.0, %v458
        %460 = vmatmul.f32.gmra.mxu0 %v427
        %v461 = vpop.f32.mrf.mxu0
        %v462 = vadd.f32 0.0, %v461
        %463 = vmatmul.f32.gmra.mxu0 %v430
        %v464 = vpop.f32.mrf.mxu0
        %v465 = vadd.f32 0.0, %v464
        %466 = vmatmul.f32.gmra.mxu0 %v433
        %v467 = vpop.f32.mrf.mxu0
        %v468 = vadd.f32 0.0, %v467
        %469 = vmatmul.f32.gmra.mxu0 %v436
        %v470 = vpop.f32.mrf.mxu0
        %v471 = vadd.f32 0.0, %v470
        %472 = vdwg.mxu0
        %473 = vmatpush.msra.mxu0 0.0
        %474 = vmatpush.msra.mxu0 0.0
        %475 = vmatpush.msra.mxu0 0.0
        %476 = vmatpush.msra.mxu0 0.0
        %477 = vmatpush.msra.mxu0 0.0
        %478 = vmatpush.msra.mxu0 0.0
        %479 = vmatpush.msra.mxu0 0.0
        %480 = vmatpush.msra.mxu0 0.0
        %481 = vmatpush.msra.mxu0 0.0
        %482 = vmatpush.msra.mxu0 0.0
        %483 = vmatpush.msra.mxu0 0.0
        %484 = vmatpush.msra.mxu0 0.0
        %485 = vmatpush.msra.mxu0 0.0
        %486 = vmatpush.msra.mxu0 0.0
        %487 = vmatpush.msra.mxu0 %v412
        %488 = vmatpush.msra.mxu0 %v410
        %489 = vmatmul.f32.gmra.mxu0 %v421
        %v490 = vpop.f32.mrf.mxu0
        %v491 = vadd.f32 0.0, %v490
        %492 = vmatmul.f32.gmra.mxu0 %v424
        %v493 = vpop.f32.mrf.mxu0
        %v494 = vadd.f32 0.0, %v493
        %495 = vmatmul.f32.gmra.mxu0 %v427
        %v496 = vpop.f32.mrf.mxu0
        %v497 = vadd.f32 0.0, %v496
        %498 = vmatmul.f32.gmra.mxu0 %v430
        %v499 = vpop.f32.mrf.mxu0
        %v500 = vadd.f32 0.0, %v499
        %501 = vmatmul.f32.gmra.mxu0 %v433
        %v502 = vpop.f32.mrf.mxu0
        %v503 = vadd.f32 0.0, %v502
        %504 = vmatmul.f32.gmra.mxu0 %v436
        %v505 = vpop.f32.mrf.mxu0
        %v506 = vadd.f32 0.0, %v505
        %507 = vdwg.mxu0
        %v508 = vmax.f32 %v456, 0.0
        %v509 = vmax.f32 %v491, 0.0
        %v510 = vmax.f32 %v459, 0.0
        %v511 = vmax.f32 %v494, 0.0
        %v512 = vmax.f32 %v462, 0.0
        %v513 = vmax.f32 %v497, 0.0
        %v514 = vmax.f32 %v465, 0.0
        %v515 = vmax.f32 %v500, 0.0
        %v516 = vmul.f32 %v508, %v508
        %v517 = vmul.f32 %v509, %v509
        %v518 = vmul.f32 %v510, %v510
        %v519 = vmul.f32 %v511, %v511
        %v520 = vmul.f32 %v512, %v512
        %v521 = vmul.f32 %v513, %v513
        %v522 = vmul.f32 %v514, %v514
        %v523 = vmul.f32 %v515, %v515
        %v524 = vxor.u32 %v468, 2147483648
        %v525 = vxor.u32 %v503, 2147483648
        %v526 = vxor.u32 %v471, 2147483648
        %v527 = vxor.u32 %v506, 2147483648
        %v528 = vmul.f32 %v524, 1.442695
        %v529 = vpow.pop %v528
        %v530 = vmul.f32 %v525, 1.442695
        %v531 = vpow.pop %v530
        %v532 = vmul.f32 %v526, 1.442695
        %v533 = vpow.pop %v532
        %v534 = vmul.f32 %v527, 1.442695
        %v535 = vpow.pop %v534
        %v536 = vadd.f32 %v529, 1.0
        %v537 = vadd.f32 %v531, 1.0
        %v538 = vadd.f32 %v533, 1.0
        %v539 = vadd.f32 %v535, 1.0
        %v540 = vrcp.pop %v536
        %v541 = vmul.f32 %v536, %v540
        %v542 = vsub.f32 1.0, %v541
        %v543 = vmul.f32 %v540, %v542
        %v544 = vadd.f32 %v540, %v543
        %vm545 = vweird.f32 %v536
        %vm546 = vweird.f32 %v540
        %vm547 = vmor %vm545, %vm546
        %v548 = vsel %vm547, %v540, %v544
        %v549 = vand.u32 2147483647, %v536
        %vm550 = vcmp.eq.f32.partialorder %v549, 8.507059e+37
        %v551 = vand.u32 %v536, 2147483648
        %v552 = vor.u32 1.1754944e-38, %v551
        %v553 = vsel %vm550, %v552, %v548
        %v554 = vmul.f32 1.0, %v553
        %v555 = vrcp.pop %v537
        %v556 = vmul.f32 %v537, %v555
        %v557 = vsub.f32 1.0, %v556
        %v558 = vmul.f32 %v555, %v557
        %v559 = vadd.f32 %v555, %v558
        %vm560 = vweird.f32 %v537
        %vm561 = vweird.f32 %v555
        %vm562 = vmor %vm560, %vm561
        %v563 = vsel %vm562, %v555, %v559
        %v564 = vand.u32 2147483647, %v537
        %vm565 = vcmp.eq.f32.partialorder %v564, 8.507059e+37
        %v566 = vand.u32 %v537, 2147483648
        %v567 = vor.u32 1.1754944e-38, %v566
        %v568 = vsel %vm565, %v567, %v563
        %v569 = vmul.f32 1.0, %v568
        %v570 = vrcp.pop %v538
        %v571 = vmul.f32 %v538, %v570
        %v572 = vsub.f32 1.0, %v571
        %v573 = vmul.f32 %v570, %v572
        %v574 = vadd.f32 %v570, %v573
        %vm575 = vweird.f32 %v538
        %vm576 = vweird.f32 %v570
        %vm577 = vmor %vm575, %vm576
        %v578 = vsel %vm577, %v570, %v574
        %v579 = vand.u32 2147483647, %v538
        %vm580 = vcmp.eq.f32.partialorder %v579, 8.507059e+37
        %v581 = vand.u32 %v538, 2147483648
        %v582 = vor.u32 1.1754944e-38, %v581
        %v583 = vsel %vm580, %v582, %v578
        %v584 = vmul.f32 1.0, %v583
        %v585 = vrcp.pop %v539
        %v586 = vmul.f32 %v539, %v585
        %v587 = vsub.f32 1.0, %v586
        %v588 = vmul.f32 %v585, %v587
        %v589 = vadd.f32 %v585, %v588
        %vm590 = vweird.f32 %v539
        %vm591 = vweird.f32 %v585
        %vm592 = vmor %vm590, %vm591
        %v593 = vsel %vm592, %v585, %v589
        %v594 = vand.u32 2147483647, %v539
        %vm595 = vcmp.eq.f32.partialorder %v594, 8.507059e+37
        %v596 = vand.u32 %v539, 2147483648
        %v597 = vor.u32 1.1754944e-38, %v596
        %v598 = vsel %vm595, %v597, %v593
        %v599 = vmul.f32 1.0, %v598
        %v600 = vld [vmem:[%s4] sm:$0xff]
        %v601 = vld [vmem:[%s4 + $0x8] sm:$0xff]
        %vm602 = vcmask 261120
        %v604 = vsel %vm602, %v600, 0
        %v607 = vsel %vm602, %v601, 0
        %609 = vmatpush.msra.mxu0 0.0
        %610 = vmatpush.msra.mxu0 0.0
        %611 = vmatpush.msra.mxu0 0.0
        %612 = vmatpush.msra.mxu0 0.0
        %613 = vmatpush.msra.mxu0 0.0
        %614 = vmatpush.msra.mxu0 0.0
        %615 = vmatpush.msra.mxu0 0.0
        %616 = vmatpush.msra.mxu0 0.0
        %617 = vmatpush.msra.mxu0 0.0
        %618 = vmatpush.msra.mxu0 0.0
        %619 = vmatpush.msra.mxu0 0.0
        %620 = vmatpush.msra.mxu0 0.0
        %621 = vmatpush.msra.mxu0 %v522
        %622 = vmatpush.msra.mxu0 %v520
        %623 = vmatpush.msra.mxu0 %v518
        %624 = vmatpush.msra.mxu0 %v516
        %625 = vmatmul.f32.gmra.mxu0 %v604
        %v626 = vpop.f32.mrf.mxu0
        %v627 = vadd.f32 0.0, %v626
        %628 = vmatmul.f32.gmra.mxu0 %v607
        %v629 = vpop.f32.mrf.mxu0
        %v630 = vadd.f32 0.0, %v629
        %631 = vdwg.mxu0
        %632 = vmatpush.msra.mxu0 0.0
        %633 = vmatpush.msra.mxu0 0.0
        %634 = vmatpush.msra.mxu0 0.0
        %635 = vmatpush.msra.mxu0 0.0
        %636 = vmatpush.msra.mxu0 0.0
        %637 = vmatpush.msra.mxu0 0.0
        %638 = vmatpush.msra.mxu0 0.0
        %639 = vmatpush.msra.mxu0 0.0
        %640 = vmatpush.msra.mxu0 0.0
        %641 = vmatpush.msra.mxu0 0.0
        %642 = vmatpush.msra.mxu0 0.0
        %643 = vmatpush.msra.mxu0 0.0
        %644 = vmatpush.msra.mxu0 %v523
        %645 = vmatpush.msra.mxu0 %v521
        %646 = vmatpush.msra.mxu0 %v519
        %647 = vmatpush.msra.mxu0 %v517
        %648 = vmatmul.f32.gmra.mxu0 %v604
        %v649 = vpop.f32.mrf.mxu0
        %v650 = vadd.f32 0.0, %v649
        %651 = vmatmul.f32.gmra.mxu0 %v607
        %v652 = vpop.f32.mrf.mxu0
        %v653 = vadd.f32 0.0, %v652
        %654 = vdwg.mxu0
        %v655 = vmul.f32 %v554, %v627
        %v656 = vmul.f32 %v569, %v650
        %v657 = vmul.f32 %v584, %v630
        %v658 = vmul.f32 %v599, %v653
        %v659 = vadd.f32 %v655, %v295
        %v660 = vadd.f32 %v656, %v318
        %v661 = vadd.f32 %v657, %v298
        %v662 = vadd.f32 %v658, %v321
        %663 = vst [vmem:[%s242] sm:$0xff] %v659
        %664 = vst [vmem:[%s242 + $0x8] sm:$0xff] %v660
        %665 = vst [vmem:[%s242 + $0x10] sm:$0xff] %v661
        %666 = vst [vmem:[%s242 + $0x18] sm:$0xff] %v662
        %s667 = sand.u32 %s153, 1
        %s668 = scalar_lea.sflag [#allocation3], %s667
        %s669 = sand.u32 %s153, 1
        %s670 = smul.addr %s669, 32
        %s671 = scalar_lea.vmem [#allocation2], %s670
        // Predicated region
        $region41: #{tpu_custom_call.1} parent=39 // pred_check
          %p672 = pneg %p163
        $region42: #{tpu_custom_call.1} parent=39 // pred_check_branch
          %674 = sbr.rel (%p672) target = $region44
        $region43: #{tpu_custom_call.1} parent=39 // pred_region
          %s675 = smul.u32 2, %s24
          %677 = vsyncadd %s668, 0
          %s678 = smul.addr %s23, 4
          %s679 = sadd.s32 %s675, %s678
          %s680 = smul.addr %s679, 8
          %s681 = scalar_lea.hbm %s5, %s680
          %s682 = sshll.u32 %s671, 4
          %s683 = int_to_ptr.vmem [resolvable:$true] %s682
          %s684 = sshll.u32 %s681, 4
          %s685 = int_to_ptr.hbm [resolvable:$true] %s684
          %690 = dma.vmem_to_hbm [thread:$0]  %s683, 512, %s685, %s668, 256, 256, 16
        $region44: #{tpu_custom_call.1} parent=39 // pred_fallthru
          _
      $region40: #{tpu_custom_call.1} parent=5 // pred_fallthru
        _
      %p691 = scmp.le.s32.totalorder 2, %s14
      // Predicated region
      $region45: #{tpu_custom_call.1} parent=5 // pred_check
        %p692 = pneg %p691
      $region46: #{tpu_custom_call.1} parent=5 // pred_check_branch
        %694 = sbr.rel (%p692) target = $region48
      $region47: #{tpu_custom_call.1} parent=5 // pred_region
        %s695 = ssub.s32 %s14, 2
        // Predicated region
        $region49: #{tpu_custom_call.1} parent=47 // pred_check
          %p696 = pneg %p169
        $region50: #{tpu_custom_call.1} parent=47 // pred_check_branch
          %698 = sbr.rel (%p696) target = $region52
        $region51: #{tpu_custom_call.1} parent=47 // pred_region
          %s699 = sand.u32 %s154, 1
          %s700 = scalar_lea.sflag [#allocation3], %s699
          %s701 = sand.u32 %s154, 1
          %s702 = smul.addr %s701, 32
          %s703 = scalar_lea.vmem [#allocation2], %s702
          %705 = dma.done %s700, 512
        $region52: #{tpu_custom_call.1} parent=47 // pred_fallthru
          _
      $region48: #{tpu_custom_call.1} parent=5 // pred_fallthru
        _
    $region6: #{tpu_custom_call.1} parent=1 // loop_footer
      %s18 = sadd.s32 1, %s14
    $region7: #{tpu_custom_call.1} parent=1 // loop_footer_branch
      %13 = sbr.rel target = $region3
    $region8: #{tpu_custom_call.1} parent=1 // loop_exit
      _
    %706 = vsyncpa [#allocation3], 1
    %s707 = scalar_lea.sflag [#allocation3], 1
    %708 = vsyncpa %s707, 1

</llo_original>
